<compile_context>
chip_gen: v5e
topology: v5e:2x2
jax: 0.10.0
libtpu: 0.0.40
codegen_flags: <defaults>
</compile_context>

<pallas_src>
import functools

import jax
import jax.numpy as jnp
from jax.experimental import pallas as pl
from jax.experimental.pallas import tpu as pltpu

# -------------------- small config (consistent with TransConfig) -----------
BATCH = 2
SEQ = 16
HIDDEN = 32          # hidden_size
LN_EPS = 1e-12       # layer_norm_eps


def self_output_kernel(hs_ref, res_ref, wv_ref, out_ref, *, eps, hidden):
    """One shot: dense + bias, residual add, TF-style LayerNorm."""
    # Packed parameter operand: rows [0:H] = W (stored (in, out)),
    # row H = bias, H+1 = gamma, H+2 = beta.  Static slices are free views.
    w = wv_ref[pl.ds(0, hidden), :]            # (H, H)
    bias = wv_ref[pl.ds(hidden, 1), :]         # (1, H)
    gamma = wv_ref[pl.ds(hidden + 1, 1), :]    # (1, H)
    beta = wv_ref[pl.ds(hidden + 2, 1), :]     # (1, H)

    hs = hs_ref[...]                           # (M, H) f32, batch folded into rows
    res = res_ref[...]                         # (M, H) residual (input_tensor)

    # dense(hidden_states); dropout == identity at inference.
    y = jnp.dot(hs, w, preferred_element_type=jnp.float32) + bias
    x = y + res

    # LayerNorm with two *independent* row reductions (can overlap on the XLU):
    #   mean = sum(x)/H ;  var = sum(x*x)/H - mean^2   (biased variance)
    inv_h = jnp.float32(1.0 / hidden)
    s1 = jnp.sum(x, axis=-1, keepdims=True)
    s2 = jnp.sum(x * x, axis=-1, keepdims=True)
    mean = s1 * inv_h
    var = s2 * inv_h - mean * mean
    inv_std = jax.lax.rsqrt(var + eps)         # EUP slot, no VPU divide
    out_ref[...] = ((x - mean) * inv_std * gamma + beta).astype(out_ref.dtype)


def trans_self_output(hidden_states, input_tensor, params):
    """hidden_states, input_tensor: (B, S, H).  params['w'] is (in, out)."""
    B, S, H = hidden_states.shape
    M = B * S

    # Fold batch into rows (free contiguous reshape); reshape back after.
    hs2d = hidden_states.reshape(M, H)
    res2d = input_tensor.reshape(M, H)

    # One packed parameter operand (H+3, H).  Parameters are static, so in a
    # real deployment this buffer would be materialized once at init; here
    # XLA hoists/folds the concat outside the hot path.
    wv = jnp.concatenate(
        [params["w"],
         params["b"][None, :],
         params["gamma"][None, :],
         params["beta"][None, :]],
        axis=0,
    )

    kernel = functools.partial(self_output_kernel, eps=LN_EPS, hidden=H)
    vmem = pl.BlockSpec(memory_space=pltpu.MemorySpace.VMEM)  # whole array in VMEM

    out2d = pl.pallas_call(
        kernel,
        out_shape=jax.ShapeDtypeStruct((M, H), jnp.float32),
        in_specs=[vmem, vmem, vmem],
        out_specs=vmem,
    )(hs2d, res2d, wv)

    return out2d.reshape(B, S, H)


def init_params(key):
    """Deterministic synthetic weights; linear weight stored (in, out)."""
    kw, kb = jax.random.split(key)
    std = 0.02
    return {
        "w": jax.random.normal(kw, (HIDDEN, HIDDEN), jnp.float32) * std,
        "b": jax.random.normal(kb, (HIDDEN,), jnp.float32) * std,
        "gamma": jnp.ones((HIDDEN,), jnp.float32),
        "beta": jnp.zeros((HIDDEN,), jnp.float32),
    }


def reference(hidden_states, input_tensor, p):
    """Pure-JAX mirror of TransSelfOutput.forward (eval mode)."""
    h = hidden_states @ p["w"] + p["b"]
    x = h + input_tensor
    u = jnp.mean(x, -1, keepdims=True)
    s = jnp.mean((x - u) ** 2, -1, keepdims=True)
    return p["gamma"] * ((x - u) / jnp.sqrt(s + LN_EPS)) + p["beta"]


if __name__ == "__main__":
    key = jax.random.PRNGKey(0)
    k_hs, k_res, k_p = jax.random.split(key, 3)
    hidden_states = jax.random.normal(k_hs, (BATCH, SEQ, HIDDEN), jnp.float32)
    input_tensor = jax.random.normal(k_res, (BATCH, SEQ, HIDDEN), jnp.float32)
    params = init_params(k_p)

    out = trans_self_output(hidden_states, input_tensor, params)
    out = jax.block_until_ready(out)

    ref = reference(hidden_states, input_tensor, params)
    assert out.shape == (BATCH, SEQ, HIDDEN)
    assert bool(jnp.max(jnp.abs(out - ref)) < 1e-3), "mismatch vs reference"
    print("KERNEL_OK")
</pallas_src>

<mosaic_0001>
module attributes {stable_mosaic.version = 11 : i64} {
  func.func @self_output_kernel(%arg0: memref<32x32xf32, #tpu.memory_space<vmem>>, %arg1: memref<32x32xf32, #tpu.memory_space<vmem>>, %arg2: memref<35x32xf32, #tpu.memory_space<vmem>>, %arg3: memref<32x32xf32, #tpu.memory_space<vmem>>) attributes {dimension_semantics = [], scalar_prefetch = 0 : i64, scratch_operands = 0 : i64, tpu.core_type = #tpu.core_type<tc>} {
    %c0 = arith.constant 0 : index
    %c0_0 = arith.constant 0 : index
    %0 = vector.load %arg2[%c0, %c0_0] : memref<35x32xf32, #tpu.memory_space<vmem>>, vector<32x32xf32>
    %c32 = arith.constant 32 : index
    %c0_1 = arith.constant 0 : index
    %1 = vector.load %arg2[%c32, %c0_1] : memref<35x32xf32, #tpu.memory_space<vmem>>, vector<1x32xf32>
    %c33 = arith.constant 33 : index
    %c0_2 = arith.constant 0 : index
    %2 = vector.load %arg2[%c33, %c0_2] : memref<35x32xf32, #tpu.memory_space<vmem>>, vector<1x32xf32>
    %c34 = arith.constant 34 : index
    %c0_3 = arith.constant 0 : index
    %3 = vector.load %arg2[%c34, %c0_3] : memref<35x32xf32, #tpu.memory_space<vmem>>, vector<1x32xf32>
    %c0_4 = arith.constant 0 : index
    %c0_5 = arith.constant 0 : index
    %4 = vector.load %arg0[%c0_4, %c0_5] : memref<32x32xf32, #tpu.memory_space<vmem>>, vector<32x32xf32>
    %c0_6 = arith.constant 0 : index
    %c0_7 = arith.constant 0 : index
    %5 = vector.load %arg1[%c0_6, %c0_7] : memref<32x32xf32, #tpu.memory_space<vmem>>, vector<32x32xf32>
    %cst = arith.constant dense<0.000000e+00> : vector<32x32xf32>
    %6 = tpu.matmul %4, %0, %cst {dimension_numbers = #tpu.dot_dimension_numbers<[1], [0], [0], [1], [0, 0, 1, 1], [], []>} : vector<32x32xf32>, vector<32x32xf32>, vector<32x32xf32> -> vector<32x32xf32>
    %7 = vector.broadcast %1 : vector<1x32xf32> to vector<32x32xf32>
    %8 = arith.addf %6, %7 : vector<32x32xf32>
    %9 = arith.addf %8, %5 : vector<32x32xf32>
    %cst_8 = arith.constant dense<0.000000e+00> : vector<32xf32>
    %10 = vector.multi_reduction <add>, %9, %cst_8 [1] : vector<32x32xf32> to vector<32xf32>
    %11 = vector.shape_cast %10 : vector<32xf32> to vector<32x1xf32>
    %12 = arith.mulf %9, %9 : vector<32x32xf32>
    %cst_9 = arith.constant dense<0.000000e+00> : vector<32xf32>
    %13 = vector.multi_reduction <add>, %12, %cst_9 [1] : vector<32x32xf32> to vector<32xf32>
    %14 = vector.shape_cast %13 : vector<32xf32> to vector<32x1xf32>
    %cst_10 = arith.constant 3.125000e-02 : f32
    %15 = vector.broadcast %cst_10 : f32 to vector<32x1xf32>
    %16 = arith.mulf %11, %15 : vector<32x1xf32>
    %cst_11 = arith.constant 3.125000e-02 : f32
    %17 = vector.broadcast %cst_11 : f32 to vector<32x1xf32>
    %18 = arith.mulf %14, %17 : vector<32x1xf32>
    %19 = arith.mulf %16, %16 : vector<32x1xf32>
    %20 = arith.subf %18, %19 : vector<32x1xf32>
    %cst_12 = arith.constant 9.99999996E-13 : f32
    %21 = vector.broadcast %cst_12 : f32 to vector<32x1xf32>
    %22 = arith.addf %20, %21 : vector<32x1xf32>
    %23 = math.rsqrt %22 : vector<32x1xf32>
    %24 = vector.broadcast %16 : vector<32x1xf32> to vector<32x32xf32>
    %25 = arith.subf %9, %24 : vector<32x32xf32>
    %26 = vector.broadcast %23 : vector<32x1xf32> to vector<32x32xf32>
    %27 = arith.mulf %25, %26 : vector<32x32xf32>
    %28 = vector.broadcast %2 : vector<1x32xf32> to vector<32x32xf32>
    %29 = arith.mulf %27, %28 : vector<32x32xf32>
    %30 = vector.broadcast %3 : vector<1x32xf32> to vector<32x32xf32>
    %31 = arith.addf %29, %30 : vector<32x32xf32>
    %c0_13 = arith.constant 0 : index
    %c0_14 = arith.constant 0 : index
    %32 = vector.load %arg3[%c0_13, %c0_14] : memref<32x32xf32, #tpu.memory_space<vmem>>, vector<32x32xf32>
    tpu.vector_store %arg3[%c0_13, %c0_14], %31 {strides = array<i32>} : memref<32x32xf32, #tpu.memory_space<vmem>>, vector<32x32xf32>,
    return
  }
}

</mosaic_0001>

<llo_original>
// kernel: tpu_custom_call.1
$region0: #{tpu_custom_call.1}
  #allocation0 [shape = 'u32[]', space=smem, size = 0x4, offset = 0x4, fixed_abs, tag = 'smem constant byte address 0x4 - core index']
  #allocation1 [shape = 'u32[72,128]{1,0:T(1,128)}', space=vmem, size = 0x9000, scoped, tag = 'internal scratch']
  %s0 = inlined_call_operand.vmem [shape: f32[32,32], index: 0, kind: input, shape index: {}]
  %s1 = inlined_call_operand.vmem [shape: f32[32,32], index: 1, kind: input, shape index: {}]
  %s2 = inlined_call_operand.vmem [shape: f32[35,32], index: 2, kind: input, shape index: {}]
  %s3 = inlined_call_operand.hbm [shape: f32[32,32], index: 3, kind: output, shape index: {}]
  %s4 = sld [smem:[#allocation0]]
  $region22: #{tpu_custom_call.1} parent=0
    _
  %s6 = ssub.s32 1, %s4
  %s7 = scalar_select 0, %s6, %s4
  $region1: #{tpu_custom_call.1} parent=0
    #allocation2 [shape = 'u8[16384]{0}', space=vmem, size = 0x4000, scoped, tag = 'output window, operand 0, single buffered']
    #allocation3 [shape = 's32[1]{0}', space=sflag, size = 0x4, scoped, tag = 'scoped memory for tpu_custom_call.1']
    %8 = vsyncpa [#allocation3], 0
    // Predicated region
    $region2: #{tpu_custom_call.1} parent=1 // pred_check
      _
    $region3: #{tpu_custom_call.1} parent=1 // pred_check_branch
      %10 = sbr.rel (0) target = $region5
    $region4: #{tpu_custom_call.1} parent=1 // pred_region
      _
    $region5: #{tpu_custom_call.1} parent=1 // pred_fallthru
      _
    // Predicated region
    $region6: #{tpu_custom_call.1} parent=1 // pred_check
      _
    $region7: #{tpu_custom_call.1} parent=1 // pred_check_branch
      %12 = sbr.rel (0) target = $region9
    $region8: #{tpu_custom_call.1} parent=1 // pred_region
      _
    $region9: #{tpu_custom_call.1} parent=1 // pred_fallthru
      _
    // Predicated region
    $region10: #{tpu_custom_call.1} parent=1 // pred_check
      _
    $region11: #{tpu_custom_call.1} parent=1 // pred_check_branch
      %14 = sbr.rel (0) target = $region13
    $region12: #{tpu_custom_call.1} parent=1 // pred_region
      _
    $region13: #{tpu_custom_call.1} parent=1 // pred_fallthru
      _
    %v15 = vld [vmem:[%s2] sm:$0xff]
    %v16 = vld [vmem:[%s2 + $0x8] sm:$0xff]
    %v17 = vld [vmem:[%s2 + $0x10] sm:$0xff]
    %v18 = vld [vmem:[%s2 + $0x18] sm:$0xff]
    %v19 = vld [vmem:[%s2 + $0x20] sm:$0x1]
    %v20 = vld [vmem:[%s2 + $0x21] sm:$0x1]
    %v21 = vld [vmem:[%s2 + $0x22] sm:$0x1]
    %v22 = vld [vmem:[%s0] sm:$0xff]
    %v23 = vld [vmem:[%s0 + $0x8] sm:$0xff]
    %v24 = vld [vmem:[%s0 + $0x10] sm:$0xff]
    %v25 = vld [vmem:[%s0 + $0x18] sm:$0xff]
    %v26 = vld [vmem:[%s1] sm:$0xff]
    %v27 = vld [vmem:[%s1 + $0x8] sm:$0xff]
    %v28 = vld [vmem:[%s1 + $0x10] sm:$0xff]
    %v29 = vld [vmem:[%s1 + $0x18] sm:$0xff]
    %v30 = vperm.slane %v19, 0
    %vm31 = vcmask 261120
    %v33 = vsel %vm31, %v22, 0
    %v36 = vsel %vm31, %v23, 0
    %v39 = vsel %vm31, %v24, 0
    %v42 = vsel %vm31, %v25, 0
    %44 = vmatpush.msra.mxu0 0.0
    %45 = vmatpush.msra.mxu0 0.0
    %46 = vmatpush.msra.mxu0 0.0
    %47 = vmatpush.msra.mxu0 0.0
    %48 = vmatpush.msra.mxu0 0.0
    %49 = vmatpush.msra.mxu0 0.0
    %50 = vmatpush.msra.mxu0 0.0
    %51 = vmatpush.msra.mxu0 0.0
    %52 = vmatpush.msra.mxu0 0.0
    %53 = vmatpush.msra.mxu0 0.0
    %54 = vmatpush.msra.mxu0 0.0
    %55 = vmatpush.msra.mxu0 0.0
    %56 = vmatpush.msra.mxu0 %v18
    %57 = vmatpush.msra.mxu0 %v17
    %58 = vmatpush.msra.mxu0 %v16
    %59 = vmatpush.msra.mxu0 %v15
    %60 = vmatmul.f32.gmra.mxu0 %v33
    %v61 = vpop.f32.mrf.mxu0
    %v62 = vadd.f32 %v30, %v61
    %63 = vmatmul.f32.gmra.mxu0 %v36
    %v64 = vpop.f32.mrf.mxu0
    %v65 = vadd.f32 %v30, %v64
    %66 = vmatmul.f32.gmra.mxu0 %v39
    %v67 = vpop.f32.mrf.mxu0
    %v68 = vadd.f32 %v30, %v67
    %69 = vmatmul.f32.gmra.mxu0 %v42
    %v70 = vpop.f32.mrf.mxu0
    %v71 = vadd.f32 %v30, %v70
    %72 = vdwg.mxu0
    %v73 = vadd.f32 %v62, %v26
    %v74 = vadd.f32 %v65, %v27
    %v75 = vadd.f32 %v68, %v28
    %v76 = vadd.f32 %v71, %v29
    %v77 = vsel %vm31, %v73, 0.0
    %78 = vadd.xlane.f32.xlu0 %v77
    %v79 = vpop.xlane.xlu0 %78
    %v80 = vsel %vm31, %v74, 0.0
    %81 = vadd.xlane.f32.xlu0 %v80
    %v82 = vpop.xlane.xlu0 %81
    %v83 = vsel %vm31, %v75, 0.0
    %84 = vadd.xlane.f32.xlu0 %v83
    %v85 = vpop.xlane.xlu0 %84
    %v86 = vsel %vm31, %v76, 0.0
    %87 = vadd.xlane.f32.xlu0 %v86
    %v88 = vpop.xlane.xlu0 %87
    %v89 = vmul.f32 %v73, %v73
    %v90 = vmul.f32 %v74, %v74
    %v91 = vmul.f32 %v75, %v75
    %v92 = vmul.f32 %v76, %v76
    %v93 = vsel %vm31, %v89, 0.0
    %94 = vadd.xlane.f32.xlu0 %v93
    %v95 = vpop.xlane.xlu0 %94
    %v96 = vsel %vm31, %v90, 0.0
    %97 = vadd.xlane.f32.xlu0 %v96
    %v98 = vpop.xlane.xlu0 %97
    %v99 = vsel %vm31, %v91, 0.0
    %100 = vadd.xlane.f32.xlu0 %v99
    %v101 = vpop.xlane.xlu0 %100
    %v102 = vsel %vm31, %v92, 0.0
    %103 = vadd.xlane.f32.xlu0 %v102
    %v104 = vpop.xlane.xlu0 %103
    %v105 = vmul.f32 %v79, 0.03125
    %v106 = vmul.f32 %v82, 0.03125
    %v107 = vmul.f32 %v85, 0.03125
    %v108 = vmul.f32 %v88, 0.03125
    %v109 = vmul.f32 %v95, 0.03125
    %v110 = vmul.f32 %v98, 0.03125
    %v111 = vmul.f32 %v101, 0.03125
    %v112 = vmul.f32 %v104, 0.03125
    %v113 = vmul.f32 %v105, %v105
    %v114 = vmul.f32 %v106, %v106
    %v115 = vmul.f32 %v107, %v107
    %v116 = vmul.f32 %v108, %v108
    %v117 = vsub.f32 %v109, %v113
    %v118 = vsub.f32 %v110, %v114
    %v119 = vsub.f32 %v111, %v115
    %v120 = vsub.f32 %v112, %v116
    %v121 = vadd.f32 %v117, 1e-12
    %v122 = vadd.f32 %v118, 1e-12
    %v123 = vadd.f32 %v119, 1e-12
    %v124 = vadd.f32 %v120, 1e-12
    %v125 = vrsqrt.pop %v121
    %v126 = vmul.f32 %v125, %v121
    %v127 = vmul.f32 %v126, %v125
    %v128 = vmul.f32 0.5, %v127
    %v129 = vsub.f32 1.5, %v128
    %v130 = vmul.f32 %v125, %v129
    %vm131 = vweird.f32 %v121
    %vm132 = vweird.f32 %v125
    %vm133 = vmor %vm131, %vm132
    %v134 = vsel %vm133, %v125, %v130
    %v135 = vrsqrt.pop %v122
    %v136 = vmul.f32 %v135, %v122
    %v137 = vmul.f32 %v136, %v135
    %v138 = vmul.f32 0.5, %v137
    %v139 = vsub.f32 1.5, %v138
    %v140 = vmul.f32 %v135, %v139
    %vm141 = vweird.f32 %v122
    %vm142 = vweird.f32 %v135
    %vm143 = vmor %vm141, %vm142
    %v144 = vsel %vm143, %v135, %v140
    %v145 = vrsqrt.pop %v123
    %v146 = vmul.f32 %v145, %v123
    %v147 = vmul.f32 %v146, %v145
    %v148 = vmul.f32 0.5, %v147
    %v149 = vsub.f32 1.5, %v148
    %v150 = vmul.f32 %v145, %v149
    %vm151 = vweird.f32 %v123
    %vm152 = vweird.f32 %v145
    %vm153 = vmor %vm151, %vm152
    %v154 = vsel %vm153, %v145, %v150
    %v155 = vrsqrt.pop %v124
    %v156 = vmul.f32 %v155, %v124
    %v157 = vmul.f32 %v156, %v155
    %v158 = vmul.f32 0.5, %v157
    %v159 = vsub.f32 1.5, %v158
    %v160 = vmul.f32 %v155, %v159
    %vm161 = vweird.f32 %v124
    %vm162 = vweird.f32 %v155
    %vm163 = vmor %vm161, %vm162
    %v164 = vsel %vm163, %v155, %v160
    %v165 = vsub.f32 %v73, %v105
    %v166 = vsub.f32 %v74, %v106
    %v167 = vsub.f32 %v75, %v107
    %v168 = vsub.f32 %v76, %v108
    %v169 = vmul.f32 %v165, %v134
    %v170 = vmul.f32 %v166, %v144
    %v171 = vmul.f32 %v167, %v154
    %v172 = vmul.f32 %v168, %v164
    %v173 = vperm.slane %v20, 0
    %v174 = vmul.f32 %v169, %v173
    %v175 = vmul.f32 %v170, %v173
    %v176 = vmul.f32 %v171, %v173
    %v177 = vmul.f32 %v172, %v173
    %v178 = vperm.slane %v21, 0
    %v179 = vadd.f32 %v174, %v178
    %v180 = vadd.f32 %v175, %v178
    %v181 = vadd.f32 %v176, %v178
    %v182 = vadd.f32 %v177, %v178
    %183 = vst.msk [vmem:[#allocation2] sm:$0xff] %vm31, %v179
    %184 = vst.msk [vmem:[#allocation2 + $0x8] sm:$0xff] %vm31, %v180
    %185 = vst.msk [vmem:[#allocation2 + $0x10] sm:$0xff] %vm31, %v181
    %186 = vst.msk [vmem:[#allocation2 + $0x18] sm:$0xff] %vm31, %v182
    // Predicated region
    $region14: #{tpu_custom_call.1} parent=1 // pred_check
      _
    $region15: #{tpu_custom_call.1} parent=1 // pred_check_branch
      %188 = sbr.rel (0) target = $region17
    $region16: #{tpu_custom_call.1} parent=1 // pred_region
      %190 = vsyncadd [#allocation3], 0
      %s191 = sshll.u32 [#allocation2], 4
      %s192 = int_to_ptr.vmem [resolvable:$true] %s191
      %s193 = sshll.u32 %s3, 4
      %s194 = int_to_ptr.hbm [resolvable:$true] %s193
      %199 = dma.vmem_to_hbm [thread:$0]  %s192, 512, %s194, [#allocation3], 128, 128, 8
    $region17: #{tpu_custom_call.1} parent=1 // pred_fallthru
      _
    // Predicated region
    $region18: #{tpu_custom_call.1} parent=1 // pred_check
      _
    $region19: #{tpu_custom_call.1} parent=1 // pred_check_branch
      %201 = sbr.rel (0) target = $region21
    $region20: #{tpu_custom_call.1} parent=1 // pred_region
      %203 = dma.done [#allocation3], 512
    $region21: #{tpu_custom_call.1} parent=1 // pred_fallthru
      _
    %204 = vsyncpa [#allocation3], 1

</llo_original>
